<compile_context>
chip_gen: v7x
topology: tpu7x:2x2x1
jax: 0.10.0
libtpu: 0.0.40
codegen_flags: <defaults>
</compile_context>

<pallas_src>
import functools
import math

import jax
import jax.numpy as jnp
from jax.experimental import pallas as pl
from jax.experimental.pallas import tpu as pltpu


_LANES = 128
_SUBLANES = 8
_MAX_BLOCK_ROWS = 4096          # 4096 x 128 f32 = 2 MiB per array per block
_MEGACORE_SPLIT_ROWS = 2048     # buffers > ~1 MiB: force >= 2 grid steps (v7x)
_FAST_PATH_MAX_ELEMS = 128 * 1024  # below this, skip Pallas (launch dominates)


def _cdiv(a, b):
    return -(-a // b)


def _round_up(a, b):
    return _cdiv(a, b) * b


# ----------------------------------------------------------------------------
# Kernel: elementwise EMA update on one lane-dense [block_rows, 128] tile.
# ----------------------------------------------------------------------------
def _ema_kernel(hidden_ref, x_ref, inv_corr_ref,
                new_hidden_ref, avg_ref, *, one_minus_decay):
    h = hidden_ref[...]
    x = x_ref[...]
    new_h = h - (h - x) * one_minus_decay
    new_hidden_ref[...] = new_h
    # Bias correction: multiply by precomputed scalar 1/(1 - decay**counter).
    avg_ref[...] = new_h * inv_corr_ref[0]


def _lane_dense_layout(total):
    """Static layout choice -> (rows, block_rows).

    rows is padded only to a multiple of 8 sublanes (<= 4 KiB waste / array).
    """
    rows = _round_up(_cdiv(total, _LANES), _SUBLANES)
    if rows <= _MAX_BLOCK_ROWS:
        if rows > _MEGACORE_SPLIT_ROWS and rows % (2 * _SUBLANES) == 0:
            # Mid-sized buffer: split into 2 parallel blocks so both v7x
            # TensorCores participate (no effect on single-TC v5e/v6e).
            block_rows = rows // 2
        else:
            block_rows = rows
    else:
        block_rows = _MAX_BLOCK_ROWS
    return rows, block_rows


def _ema_pallas(hidden2d, x2d, inv_corr, *, decay, block_rows):
    rows, lanes = hidden2d.shape
    grid = (_cdiv(rows, block_rows),)   # partial last block handled by Pallas
    vspec = pl.BlockSpec((block_rows, lanes), lambda i: (i, 0))
    return pl.pallas_call(
        functools.partial(_ema_kernel, one_minus_decay=1.0 - decay),
        out_shape=(
            jax.ShapeDtypeStruct((rows, lanes), hidden2d.dtype),   # new hidden
            jax.ShapeDtypeStruct((rows, lanes), hidden2d.dtype),   # average
        ),
        grid=grid,
        in_specs=[
            vspec,                                                  # hidden
            vspec,                                                  # x
            pl.BlockSpec(memory_space=pltpu.MemorySpace.SMEM),      # 1/corr
        ],
        out_specs=(vspec, vspec),
        input_output_aliases={0: 0},      # hidden updated in place (+ donation)
        compiler_params=pltpu.CompilerParams(
            dimension_semantics=("parallel",),
            vmem_limit_bytes=48 * 1024 * 1024,
        ),
    )(hidden2d, x2d, inv_corr)


# ----------------------------------------------------------------------------
# Per-step functions (jitted with donated state so updates are in place).
# ----------------------------------------------------------------------------
def _ema_step_pallas(counter, hidden2d, x, *, decay, orig_shape, total,
                     block_rows):
    """One forward() step; state kept in padded lane-dense [rows, 128] form."""
    rows = hidden2d.shape[0]
    padded_total = rows * _LANES

    # Scalar state update (off the kernel's critical path).
    new_counter = counter + 1
    corr = 1.0 - jnp.power(jnp.float32(decay), new_counter.astype(jnp.float32))
    inv_corr = (1.0 / corr).astype(jnp.float32)            # f32[1]

    # x is the only array converted per step (one unavoidable pass).
    x_flat = x.astype(hidden2d.dtype).reshape(-1)
    if padded_total != total:
        x_flat = jnp.pad(x_flat, (0, padded_total - total))
    x2d = x_flat.reshape(rows, _LANES)

    new_h2d, avg2d = _ema_pallas(hidden2d, x2d, inv_corr,
                                 decay=decay, block_rows=block_rows)

    # Average is returned to the caller in the original shape.
    avg_flat = avg2d.reshape(-1)
    if padded_total != total:
        avg_flat = avg_flat[:total]
    average = avg_flat.reshape(orig_shape)
    return new_counter, new_h2d, average


def _ema_step_jnp(counter, hidden, x, *, decay):
    """Fast path for tiny buffers: one fused elementwise op, no Pallas launch."""
    new_counter = counter + 1
    new_hidden = hidden - (hidden - x.astype(hidden.dtype)) * (1.0 - decay)
    corr = 1.0 - jnp.power(jnp.float32(decay),
                           new_counter.astype(jnp.float32)[0])
    average = new_hidden / corr
    return new_counter, new_hidden, average


# ----------------------------------------------------------------------------
# Module wrapper (explicit state).
# ----------------------------------------------------------------------------
class SonnetEMA:
    """JAX/Pallas port of the PyTorch SonnetEMA module."""

    def __init__(self, decay, shape, *, force_pallas=False):
        self.decay = float(decay)
        self.shape = tuple(shape)
        self._total = int(math.prod(self.shape))
        # NOTE: PyTorch uses int64 for the counter; int32 is plenty for a step
        # counter and keeps the scalar path TPU-friendly.
        self.counter = jnp.zeros((1,), dtype=jnp.int32)
        self.average = jnp.zeros(self.shape, dtype=jnp.float32)

        self._use_pallas = force_pallas or self._total >= _FAST_PATH_MAX_ELEMS
        if self._use_pallas:
            rows, block_rows = _lane_dense_layout(self._total)
            # Hidden state persisted in padded lane-dense [rows, 128] layout.
            self._hidden2d = jnp.zeros((rows, _LANES), dtype=jnp.float32)
            self._step = jax.jit(
                functools.partial(_ema_step_pallas, decay=self.decay,
                                  orig_shape=self.shape, total=self._total,
                                  block_rows=block_rows),
                donate_argnums=(0, 1))
        else:
            self._hidden = jnp.zeros(self.shape, dtype=jnp.float32)
            self._step = jax.jit(
                functools.partial(_ema_step_jnp, decay=self.decay),
                donate_argnums=(0, 1))

    @property
    def hidden(self):
        if self._use_pallas:
            flat = self._hidden2d.reshape(-1)[: self._total]
            return flat.reshape(self.shape)
        return self._hidden

    def forward(self, x):
        if self._use_pallas:
            self.counter, self._hidden2d, self.average = self._step(
                self.counter, self._hidden2d, x)
        else:
            self.counter, self._hidden, self.average = self._step(
                self.counter, self._hidden, x)
        return self.average

    __call__ = forward


def _reference_forward(counter, hidden, x, decay):
    """Pure-JAX reference of one forward() call, for verification."""
    c = counter + 1
    h = hidden - (hidden - x) * (1.0 - decay)
    avg = h / (1.0 - decay ** c.astype(jnp.float32)[0])
    return c, h, avg


if __name__ == "__main__":
    key = jax.random.PRNGKey(0)

    # --- 1) Codebook-sized buffer, forced through the Pallas path ------------
    decay = 0.99
    shape = (512, 64)            # lane-dense: 256 x 128 f32
    ema = SonnetEMA(decay, shape, force_pallas=True)

    ref_counter = jnp.zeros((1,), dtype=jnp.int32)
    ref_hidden = jnp.zeros(shape, dtype=jnp.float32)
    for step in range(3):
        key, sub = jax.random.split(key)
        x = jax.random.normal(sub, shape, dtype=jnp.float32)

        out = ema(x)
        jax.block_until_ready(out)

        ref_counter, ref_hidden, ref_avg = _reference_forward(
            ref_counter, ref_hidden, x, decay)
        assert jnp.allclose(out, ref_avg, atol=1e-5, rtol=1e-5), (
            f"average mismatch at step {step}")
        assert jnp.allclose(ema.hidden, ref_hidden, atol=1e-6, rtol=1e-6), (
            f"hidden mismatch at step {step}")
        assert int(ema.counter[0]) == int(ref_counter[0])

    # --- 2) Tiny VQ-VAE buffer -> fused jnp fast path (no Pallas launch) -----
    shape2 = (16, 32)
    ema2 = SonnetEMA(decay, shape2)
    key, sub = jax.random.split(key)
    x2 = jax.random.normal(sub, shape2, dtype=jnp.float32)
    out2 = ema2(x2)
    jax.block_until_ready(out2)
    _, ref_h2, ref_a2 = _reference_forward(
        jnp.zeros((1,), jnp.int32), jnp.zeros(shape2, jnp.float32), x2, decay)
    assert jnp.allclose(out2, ref_a2, atol=1e-5, rtol=1e-5), "small avg mismatch"
    assert jnp.allclose(ema2.hidden, ref_h2, atol=1e-6, rtol=1e-6), (
        "small hidden mismatch")

    # --- 3) Ragged shape, forced Pallas: exercises the pad-to-[8,128] path ---
    shape3 = (10, 7)
    decay3 = 0.999
    ema3 = SonnetEMA(decay3, shape3, force_pallas=True)
    key, sub = jax.random.split(key)
    x3 = jax.random.normal(sub, shape3, dtype=jnp.float32)
    out3 = ema3(x3)
    jax.block_until_ready(out3)
    _, ref_h3, ref_a3 = _reference_forward(
        jnp.zeros((1,), jnp.int32), jnp.zeros(shape3, jnp.float32), x3, decay3)
    assert jnp.allclose(out3, ref_a3, atol=1e-5, rtol=1e-5), "ragged avg mismatch"
    assert jnp.allclose(ema3.hidden, ref_h3, atol=1e-6, rtol=1e-6), (
        "ragged hidden mismatch")

    print("KERNEL_OK")
</pallas_src>

<mosaic_0001>
module attributes {stable_mosaic.version = 11 : i64} {
  func.func @_ema_kernel(%arg0: i32, %arg1: memref<256x128xf32, #tpu.memory_space<vmem>>, %arg2: memref<256x128xf32, #tpu.memory_space<vmem>>, %arg3: memref<1xf32, #tpu.memory_space<smem>>, %arg4: memref<256x128xf32, #tpu.memory_space<vmem>>, %arg5: memref<256x128xf32, #tpu.memory_space<vmem>>) attributes {dimension_semantics = [#tpu.dimension_semantics<parallel>], iteration_bounds = array<i64: 1>, scalar_prefetch = 0 : i64, scratch_operands = 0 : i64, tpu.core_type = #tpu.core_type<tc>, window_params = [{transform_indices = @transform_0, window_bounds = array<i64: 256, 128>}, {transform_indices = @transform_1, window_bounds = array<i64: 256, 128>}, {transform_indices = @transform_2, window_bounds = array<i64: 1>}, {transform_indices = @transform_3, window_bounds = array<i64: 256, 128>}, {transform_indices = @transform_4, window_bounds = array<i64: 256, 128>}]} {
    %c0 = arith.constant 0 : index
    %c0_0 = arith.constant 0 : index
    %0 = vector.load %arg1[%c0, %c0_0] : memref<256x128xf32, #tpu.memory_space<vmem>>, vector<256x128xf32>
    %c0_1 = arith.constant 0 : index
    %c0_2 = arith.constant 0 : index
    %1 = vector.load %arg2[%c0_1, %c0_2] : memref<256x128xf32, #tpu.memory_space<vmem>>, vector<256x128xf32>
    %2 = arith.subf %0, %1 : vector<256x128xf32>
    %cst = arith.constant 0.00999999977 : f32
    %3 = vector.broadcast %cst : f32 to vector<256x128xf32>
    %4 = arith.mulf %2, %3 : vector<256x128xf32>
    %5 = arith.subf %0, %4 : vector<256x128xf32>
    %c0_3 = arith.constant 0 : index
    %c0_4 = arith.constant 0 : index
    %6 = vector.load %arg4[%c0_3, %c0_4] : memref<256x128xf32, #tpu.memory_space<vmem>>, vector<256x128xf32>
    tpu.vector_store %arg4[%c0_3, %c0_4], %5 {strides = array<i32>} : memref<256x128xf32, #tpu.memory_space<vmem>>, vector<256x128xf32>,
    %c0_5 = arith.constant 0 : index
    %7 = memref.load %arg3[%c0_5] : memref<1xf32, #tpu.memory_space<smem>>
    %8 = vector.broadcast %7 : f32 to vector<256x128xf32>
    %9 = arith.mulf %5, %8 : vector<256x128xf32>
    %c0_6 = arith.constant 0 : index
    %c0_7 = arith.constant 0 : index
    %10 = vector.load %arg5[%c0_6, %c0_7] : memref<256x128xf32, #tpu.memory_space<vmem>>, vector<256x128xf32>
    tpu.vector_store %arg5[%c0_6, %c0_7], %9 {strides = array<i32>} : memref<256x128xf32, #tpu.memory_space<vmem>>, vector<256x128xf32>,
    return
  }
  func.func @transform_0(%arg0: i32) -> (i32, i32) {
    %c0_i32 = arith.constant 0 : i32
    %c0_i32_0 = arith.constant 0 : i32
    return %arg0, %c0_i32 : i32, i32
  }
  func.func @transform_1(%arg0: i32) -> (i32, i32) {
    %c0_i32 = arith.constant 0 : i32
    %c0_i32_0 = arith.constant 0 : i32
    return %arg0, %c0_i32 : i32, i32
  }
  func.func @transform_2(%arg0: i32) -> i32 {
    %c0_i32 = arith.constant 0 : i32
    %c0_i32_0 = arith.constant 0 : i32
    return %c0_i32 : i32
  }
  func.func @transform_3(%arg0: i32) -> (i32, i32) {
    %c0_i32 = arith.constant 0 : i32
    %c0_i32_0 = arith.constant 0 : i32
    return %arg0, %c0_i32 : i32, i32
  }
  func.func @transform_4(%arg0: i32) -> (i32, i32) {
    %c0_i32 = arith.constant 0 : i32
    %c0_i32_0 = arith.constant 0 : i32
    return %arg0, %c0_i32 : i32, i32
  }
}

</mosaic_0001>

<llo_original>
// kernel: _ema_step_pallas.1
$region0: #{_ema_step_pallas.1}
  #allocation0 [shape = 'u32[]', space=smem, size = 0x4, offset = 0x4, fixed_abs, tag = 'smem constant byte address 0x4 - core index']
  #allocation1 [shape = 'u32[144,128]{1,0:T(1,128)}', space=vmem, size = 0x12000, scoped, tag = 'internal scratch']
  #allocation2 [shape = 'f32[1]{0:T(128)S(6)}', space=smem, size = 0x200, scoped, tag = 'scoped memory for _ema_step_pallas.1']
  %s0 = inlined_call_operand.vmem [shape: f32[256,128], index: 0, kind: input, shape index: {}, may-alias: {0,3}]
  %s1 = inlined_call_operand.vmem [shape: f32[256,128], index: 1, kind: input, shape index: {}]
  %s2 = inlined_call_operand.<no memory space> [shape: f32[1], index: 2, kind: input, shape index: {}]
  %s3 = inlined_call_operand.vmem [shape: f32[256,128], index: 3, kind: output, shape index: {0}, may-alias: {0,3}]
  %s4 = inlined_call_operand.vmem [shape: f32[256,128], index: 4, kind: output, shape index: {1}]
  %5 = xla_tuple %s3, %s4
  %s6 = sld [smem:[#allocation0]]
  $region30: #{_ema_step_pallas.1} parent=0
    _
  %s8 = ssub.s32 1, %s6
  %s9 = scalar_select 0, %s8, %s6
  %10 = sst [smem:[#allocation2]] %s2
  // Predicated region
  $region2: #{_ema_step_pallas.1} parent=0 // pred_check
    _
  $region3: #{_ema_step_pallas.1} parent=0 // pred_check_branch
    %12 = sbr.rel (0) target = $region5
  $region4: #{_ema_step_pallas.1} parent=0 // pred_region
    _
  $region5: #{_ema_step_pallas.1} parent=0 // pred_fallthru
    _
  // Predicated region
  $region6: #{_ema_step_pallas.1} parent=0 // pred_check
    _
  $region7: #{_ema_step_pallas.1} parent=0 // pred_check_branch
    %14 = sbr.rel (0) target = $region9
  $region8: #{_ema_step_pallas.1} parent=0 // pred_region
    _
  $region9: #{_ema_step_pallas.1} parent=0 // pred_fallthru
    _
  // Predicated region
  $region10: #{_ema_step_pallas.1} parent=0 // pred_check
    _
  $region11: #{_ema_step_pallas.1} parent=0 // pred_check_branch
    %16 = sbr.rel (0) target = $region13
  $region12: #{_ema_step_pallas.1} parent=0 // pred_region
    _
  $region13: #{_ema_step_pallas.1} parent=0 // pred_fallthru
    _
  %v17 = vld [vmem:[%s0] sm:$0xff]
  %v18 = vld [vmem:[%s0 + $0x8] sm:$0xff]
  %v19 = vld [vmem:[%s0 + $0x10] sm:$0xff]
  %v20 = vld [vmem:[%s0 + $0x18] sm:$0xff]
  %v21 = vld [vmem:[%s0 + $0x20] sm:$0xff]
  %v22 = vld [vmem:[%s0 + $0x28] sm:$0xff]
  %v23 = vld [vmem:[%s0 + $0x30] sm:$0xff]
  %v24 = vld [vmem:[%s0 + $0x38] sm:$0xff]
  %v25 = vld [vmem:[%s0 + $0x40] sm:$0xff]
  %v26 = vld [vmem:[%s0 + $0x48] sm:$0xff]
  %v27 = vld [vmem:[%s0 + $0x50] sm:$0xff]
  %v28 = vld [vmem:[%s0 + $0x58] sm:$0xff]
  %v29 = vld [vmem:[%s0 + $0x60] sm:$0xff]
  %v30 = vld [vmem:[%s0 + $0x68] sm:$0xff]
  %v31 = vld [vmem:[%s0 + $0x70] sm:$0xff]
  %v32 = vld [vmem:[%s0 + $0x78] sm:$0xff]
  %v33 = vld [vmem:[%s0 + $0x80] sm:$0xff]
  %v34 = vld [vmem:[%s0 + $0x88] sm:$0xff]
  %v35 = vld [vmem:[%s0 + $0x90] sm:$0xff]
  %v36 = vld [vmem:[%s0 + $0x98] sm:$0xff]
  %v37 = vld [vmem:[%s0 + $0xa0] sm:$0xff]
  %v38 = vld [vmem:[%s0 + $0xa8] sm:$0xff]
  %v39 = vld [vmem:[%s0 + $0xb0] sm:$0xff]
  %v40 = vld [vmem:[%s0 + $0xb8] sm:$0xff]
  %v41 = vld [vmem:[%s0 + $0xc0] sm:$0xff]
  %v42 = vld [vmem:[%s0 + $0xc8] sm:$0xff]
  %v43 = vld [vmem:[%s0 + $0xd0] sm:$0xff]
  %v44 = vld [vmem:[%s0 + $0xd8] sm:$0xff]
  %v45 = vld [vmem:[%s0 + $0xe0] sm:$0xff]
  %v46 = vld [vmem:[%s0 + $0xe8] sm:$0xff]
  %v47 = vld [vmem:[%s0 + $0xf0] sm:$0xff]
  %v48 = vld [vmem:[%s0 + $0xf8] sm:$0xff]
  %v49 = vld [vmem:[%s1] sm:$0xff]
  %v50 = vld [vmem:[%s1 + $0x8] sm:$0xff]
  %v51 = vld [vmem:[%s1 + $0x10] sm:$0xff]
  %v52 = vld [vmem:[%s1 + $0x18] sm:$0xff]
  %v53 = vld [vmem:[%s1 + $0x20] sm:$0xff]
  %v54 = vld [vmem:[%s1 + $0x28] sm:$0xff]
  %v55 = vld [vmem:[%s1 + $0x30] sm:$0xff]
  %v56 = vld [vmem:[%s1 + $0x38] sm:$0xff]
  %v57 = vld [vmem:[%s1 + $0x40] sm:$0xff]
  %v58 = vld [vmem:[%s1 + $0x48] sm:$0xff]
  %v59 = vld [vmem:[%s1 + $0x50] sm:$0xff]
  %v60 = vld [vmem:[%s1 + $0x58] sm:$0xff]
  %v61 = vld [vmem:[%s1 + $0x60] sm:$0xff]
  %v62 = vld [vmem:[%s1 + $0x68] sm:$0xff]
  %v63 = vld [vmem:[%s1 + $0x70] sm:$0xff]
  %v64 = vld [vmem:[%s1 + $0x78] sm:$0xff]
  %v65 = vld [vmem:[%s1 + $0x80] sm:$0xff]
  %v66 = vld [vmem:[%s1 + $0x88] sm:$0xff]
  %v67 = vld [vmem:[%s1 + $0x90] sm:$0xff]
  %v68 = vld [vmem:[%s1 + $0x98] sm:$0xff]
  %v69 = vld [vmem:[%s1 + $0xa0] sm:$0xff]
  %v70 = vld [vmem:[%s1 + $0xa8] sm:$0xff]
  %v71 = vld [vmem:[%s1 + $0xb0] sm:$0xff]
  %v72 = vld [vmem:[%s1 + $0xb8] sm:$0xff]
  %v73 = vld [vmem:[%s1 + $0xc0] sm:$0xff]
  %v74 = vld [vmem:[%s1 + $0xc8] sm:$0xff]
  %v75 = vld [vmem:[%s1 + $0xd0] sm:$0xff]
  %v76 = vld [vmem:[%s1 + $0xd8] sm:$0xff]
  %v77 = vld [vmem:[%s1 + $0xe0] sm:$0xff]
  %v78 = vld [vmem:[%s1 + $0xe8] sm:$0xff]
  %v79 = vld [vmem:[%s1 + $0xf0] sm:$0xff]
  %v80 = vld [vmem:[%s1 + $0xf8] sm:$0xff]
  %v81 = vsub.f32 %v17, %v49
  %v82 = vsub.f32 %v18, %v50
  %v83 = vsub.f32 %v19, %v51
  %v84 = vsub.f32 %v20, %v52
  %v85 = vsub.f32 %v21, %v53
  %v86 = vsub.f32 %v22, %v54
  %v87 = vsub.f32 %v23, %v55
  %v88 = vsub.f32 %v24, %v56
  %v89 = vsub.f32 %v25, %v57
  %v90 = vsub.f32 %v26, %v58
  %v91 = vsub.f32 %v27, %v59
  %v92 = vsub.f32 %v28, %v60
  %v93 = vsub.f32 %v29, %v61
  %v94 = vsub.f32 %v30, %v62
  %v95 = vsub.f32 %v31, %v63
  %v96 = vsub.f32 %v32, %v64
  %v97 = vsub.f32 %v33, %v65
  %v98 = vsub.f32 %v34, %v66
  %v99 = vsub.f32 %v35, %v67
  %v100 = vsub.f32 %v36, %v68
  %v101 = vsub.f32 %v37, %v69
  %v102 = vsub.f32 %v38, %v70
  %v103 = vsub.f32 %v39, %v71
  %v104 = vsub.f32 %v40, %v72
  %v105 = vsub.f32 %v41, %v73
  %v106 = vsub.f32 %v42, %v74
  %v107 = vsub.f32 %v43, %v75
  %v108 = vsub.f32 %v44, %v76
  %v109 = vsub.f32 %v45, %v77
  %v110 = vsub.f32 %v46, %v78
  %v111 = vsub.f32 %v47, %v79
  %v112 = vsub.f32 %v48, %v80
  %v113 = vmul.f32 %v81, 0.01
  %v114 = vmul.f32 %v82, 0.01
  %v115 = vmul.f32 %v83, 0.01
  %v116 = vmul.f32 %v84, 0.01
  %v117 = vmul.f32 %v85, 0.01
  %v118 = vmul.f32 %v86, 0.01
  %v119 = vmul.f32 %v87, 0.01
  %v120 = vmul.f32 %v88, 0.01
  %v121 = vmul.f32 %v89, 0.01
  %v122 = vmul.f32 %v90, 0.01
  %v123 = vmul.f32 %v91, 0.01
  %v124 = vmul.f32 %v92, 0.01
  %v125 = vmul.f32 %v93, 0.01
  %v126 = vmul.f32 %v94, 0.01
  %v127 = vmul.f32 %v95, 0.01
  %v128 = vmul.f32 %v96, 0.01
  %v129 = vmul.f32 %v97, 0.01
  %v130 = vmul.f32 %v98, 0.01
  %v131 = vmul.f32 %v99, 0.01
  %v132 = vmul.f32 %v100, 0.01
  %v133 = vmul.f32 %v101, 0.01
  %v134 = vmul.f32 %v102, 0.01
  %v135 = vmul.f32 %v103, 0.01
  %v136 = vmul.f32 %v104, 0.01
  %v137 = vmul.f32 %v105, 0.01
  %v138 = vmul.f32 %v106, 0.01
  %v139 = vmul.f32 %v107, 0.01
  %v140 = vmul.f32 %v108, 0.01
  %v141 = vmul.f32 %v109, 0.01
  %v142 = vmul.f32 %v110, 0.01
  %v143 = vmul.f32 %v111, 0.01
  %v144 = vmul.f32 %v112, 0.01
  %v145 = vsub.f32 %v17, %v113
  %v146 = vsub.f32 %v18, %v114
  %v147 = vsub.f32 %v19, %v115
  %v148 = vsub.f32 %v20, %v116
  %v149 = vsub.f32 %v21, %v117
  %v150 = vsub.f32 %v22, %v118
  %v151 = vsub.f32 %v23, %v119
  %v152 = vsub.f32 %v24, %v120
  %v153 = vsub.f32 %v25, %v121
  %v154 = vsub.f32 %v26, %v122
  %v155 = vsub.f32 %v27, %v123
  %v156 = vsub.f32 %v28, %v124
  %v157 = vsub.f32 %v29, %v125
  %v158 = vsub.f32 %v30, %v126
  %v159 = vsub.f32 %v31, %v127
  %v160 = vsub.f32 %v32, %v128
  %v161 = vsub.f32 %v33, %v129
  %v162 = vsub.f32 %v34, %v130
  %v163 = vsub.f32 %v35, %v131
  %v164 = vsub.f32 %v36, %v132
  %v165 = vsub.f32 %v37, %v133
  %v166 = vsub.f32 %v38, %v134
  %v167 = vsub.f32 %v39, %v135
  %v168 = vsub.f32 %v40, %v136
  %v169 = vsub.f32 %v41, %v137
  %v170 = vsub.f32 %v42, %v138
  %v171 = vsub.f32 %v43, %v139
  %v172 = vsub.f32 %v44, %v140
  %v173 = vsub.f32 %v45, %v141
  %v174 = vsub.f32 %v46, %v142
  %v175 = vsub.f32 %v47, %v143
  %v176 = vsub.f32 %v48, %v144
  %177 = vst [vmem:[%s3] sm:$0xff] %v145
  %178 = vst [vmem:[%s3 + $0x8] sm:$0xff] %v146
  %179 = vst [vmem:[%s3 + $0x10] sm:$0xff] %v147
  %180 = vst [vmem:[%s3 + $0x18] sm:$0xff] %v148
  %181 = vst [vmem:[%s3 + $0x20] sm:$0xff] %v149
  %182 = vst [vmem:[%s3 + $0x28] sm:$0xff] %v150
  %183 = vst [vmem:[%s3 + $0x30] sm:$0xff] %v151
  %184 = vst [vmem:[%s3 + $0x38] sm:$0xff] %v152
  %185 = vst [vmem:[%s3 + $0x40] sm:$0xff] %v153
  %186 = vst [vmem:[%s3 + $0x48] sm:$0xff] %v154
  %187 = vst [vmem:[%s3 + $0x50] sm:$0xff] %v155
  %188 = vst [vmem:[%s3 + $0x58] sm:$0xff] %v156
  %189 = vst [vmem:[%s3 + $0x60] sm:$0xff] %v157
  %190 = vst [vmem:[%s3 + $0x68] sm:$0xff] %v158
  %191 = vst [vmem:[%s3 + $0x70] sm:$0xff] %v159
  %192 = vst [vmem:[%s3 + $0x78] sm:$0xff] %v160
  %193 = vst [vmem:[%s3 + $0x80] sm:$0xff] %v161
  %194 = vst [vmem:[%s3 + $0x88] sm:$0xff] %v162
  %195 = vst [vmem:[%s3 + $0x90] sm:$0xff] %v163
  %196 = vst [vmem:[%s3 + $0x98] sm:$0xff] %v164
  %197 = vst [vmem:[%s3 + $0xa0] sm:$0xff] %v165
  %198 = vst [vmem:[%s3 + $0xa8] sm:$0xff] %v166
  %199 = vst [vmem:[%s3 + $0xb0] sm:$0xff] %v167
  %200 = vst [vmem:[%s3 + $0xb8] sm:$0xff] %v168
  %201 = vst [vmem:[%s3 + $0xc0] sm:$0xff] %v169
  %202 = vst [vmem:[%s3 + $0xc8] sm:$0xff] %v170
  %203 = vst [vmem:[%s3 + $0xd0] sm:$0xff] %v171
  %204 = vst [vmem:[%s3 + $0xd8] sm:$0xff] %v172
  %205 = vst [vmem:[%s3 + $0xe0] sm:$0xff] %v173
  %206 = vst [vmem:[%s3 + $0xe8] sm:$0xff] %v174
  %207 = vst [vmem:[%s3 + $0xf0] sm:$0xff] %v175
  %208 = vst [vmem:[%s3 + $0xf8] sm:$0xff] %v176
  %s209 = sld [smem:[#allocation2]]
  %v210 = vstv %s209
  %v211 = vmul.f32 %v145, %v210
  %v212 = vmul.f32 %v146, %v210
  %v213 = vmul.f32 %v147, %v210
  %v214 = vmul.f32 %v148, %v210
  %v215 = vmul.f32 %v149, %v210
  %v216 = vmul.f32 %v150, %v210
  %v217 = vmul.f32 %v151, %v210
  %v218 = vmul.f32 %v152, %v210
  %v219 = vmul.f32 %v153, %v210
  %v220 = vmul.f32 %v154, %v210
  %v221 = vmul.f32 %v155, %v210
  %v222 = vmul.f32 %v156, %v210
  %v223 = vmul.f32 %v157, %v210
  %v224 = vmul.f32 %v158, %v210
  %v225 = vmul.f32 %v159, %v210
  %v226 = vmul.f32 %v160, %v210
  %v227 = vmul.f32 %v161, %v210
  %v228 = vmul.f32 %v162, %v210
  %v229 = vmul.f32 %v163, %v210
  %v230 = vmul.f32 %v164, %v210
  %v231 = vmul.f32 %v165, %v210
  %v232 = vmul.f32 %v166, %v210
  %v233 = vmul.f32 %v167, %v210
  %v234 = vmul.f32 %v168, %v210
  %v235 = vmul.f32 %v169, %v210
  %v236 = vmul.f32 %v170, %v210
  %v237 = vmul.f32 %v171, %v210
  %v238 = vmul.f32 %v172, %v210
  %v239 = vmul.f32 %v173, %v210
  %v240 = vmul.f32 %v174, %v210
  %v241 = vmul.f32 %v175, %v210
  %v242 = vmul.f32 %v176, %v210
  %243 = vst [vmem:[%s4] sm:$0xff] %v211
  %244 = vst [vmem:[%s4 + $0x8] sm:$0xff] %v212
  %245 = vst [vmem:[%s4 + $0x10] sm:$0xff] %v213
  %246 = vst [vmem:[%s4 + $0x18] sm:$0xff] %v214
  %247 = vst [vmem:[%s4 + $0x20] sm:$0xff] %v215
  %248 = vst [vmem:[%s4 + $0x28] sm:$0xff] %v216
  %249 = vst [vmem:[%s4 + $0x30] sm:$0xff] %v217
  %250 = vst [vmem:[%s4 + $0x38] sm:$0xff] %v218
  %251 = vst [vmem:[%s4 + $0x40] sm:$0xff] %v219
  %252 = vst [vmem:[%s4 + $0x48] sm:$0xff] %v220
  %253 = vst [vmem:[%s4 + $0x50] sm:$0xff] %v221
  %254 = vst [vmem:[%s4 + $0x58] sm:$0xff] %v222
  %255 = vst [vmem:[%s4 + $0x60] sm:$0xff] %v223
  %256 = vst [vmem:[%s4 + $0x68] sm:$0xff] %v224
  %257 = vst [vmem:[%s4 + $0x70] sm:$0xff] %v225
  %258 = vst [vmem:[%s4 + $0x78] sm:$0xff] %v226
  %259 = vst [vmem:[%s4 + $0x80] sm:$0xff] %v227
  %260 = vst [vmem:[%s4 + $0x88] sm:$0xff] %v228
  %261 = vst [vmem:[%s4 + $0x90] sm:$0xff] %v229
  %262 = vst [vmem:[%s4 + $0x98] sm:$0xff] %v230
  %263 = vst [vmem:[%s4 + $0xa0] sm:$0xff] %v231
  %264 = vst [vmem:[%s4 + $0xa8] sm:$0xff] %v232
  %265 = vst [vmem:[%s4 + $0xb0] sm:$0xff] %v233
  %266 = vst [vmem:[%s4 + $0xb8] sm:$0xff] %v234
  %267 = vst [vmem:[%s4 + $0xc0] sm:$0xff] %v235
  %268 = vst [vmem:[%s4 + $0xc8] sm:$0xff] %v236
  %269 = vst [vmem:[%s4 + $0xd0] sm:$0xff] %v237
  %270 = vst [vmem:[%s4 + $0xd8] sm:$0xff] %v238
  %271 = vst [vmem:[%s4 + $0xe0] sm:$0xff] %v239
  %272 = vst [vmem:[%s4 + $0xe8] sm:$0xff] %v240
  %273 = vst [vmem:[%s4 + $0xf0] sm:$0xff] %v241
  %274 = vst [vmem:[%s4 + $0xf8] sm:$0xff] %v242
  // Predicated region
  $region14: #{_ema_step_pallas.1} parent=0 // pred_check
    _
  $region15: #{_ema_step_pallas.1} parent=0 // pred_check_branch
    %276 = sbr.rel (0) target = $region17
  $region16: #{_ema_step_pallas.1} parent=0 // pred_region
    _
  $region17: #{_ema_step_pallas.1} parent=0 // pred_fallthru
    _
  // Predicated region
  $region18: #{_ema_step_pallas.1} parent=0 // pred_check
    _
  $region19: #{_ema_step_pallas.1} parent=0 // pred_check_branch
    %278 = sbr.rel (0) target = $region21
  $region20: #{_ema_step_pallas.1} parent=0 // pred_region
    _
  $region21: #{_ema_step_pallas.1} parent=0 // pred_fallthru
    _
  // Predicated region
  $region22: #{_ema_step_pallas.1} parent=0 // pred_check
    _
  $region23: #{_ema_step_pallas.1} parent=0 // pred_check_branch
    %280 = sbr.rel (0) target = $region25
  $region24: #{_ema_step_pallas.1} parent=0 // pred_region
    _
  $region25: #{_ema_step_pallas.1} parent=0 // pred_fallthru
    _
  // Predicated region
  $region26: #{_ema_step_pallas.1} parent=0 // pred_check
    _
  $region27: #{_ema_step_pallas.1} parent=0 // pred_check_branch
    %282 = sbr.rel (0) target = $region29
  $region28: #{_ema_step_pallas.1} parent=0 // pred_region
    _
  $region29: #{_ema_step_pallas.1} parent=0 // pred_fallthru
    _

</llo_original>
